<compile_context>
chip_gen: v7x
topology: tpu7x:2x2x1
jax: 0.10.0
libtpu: 0.0.40
codegen_flags: <defaults>
</compile_context>

<pallas_src>
import jax
import jax.numpy as jnp
import numpy as np
from jax import lax
from jax.experimental import pallas as pl
from jax.experimental.pallas import tpu as pltpu


def _fused_conv_kernel(x_ref, t_ref, b_ref, o_ref):
    """One grid step = B whole images stacked along M.

    x_ref : (B*H, K*W*Cin)    bf16 kh-concatenated, w/cin-flattened activations
    t_ref : (K*W*Cin, W*Cout) bf16 folded block-Toeplitz fused weights (grid-invariant)
    b_ref : (B*H, W*Cout)     f32 precomputed border-aware bias tile (grid-invariant)
    o_ref : (B*H, W*Cout)     lane-dense output rows (W*Cout multiple of 128)
    """
    acc = jnp.dot(x_ref[...], t_ref[...], preferred_element_type=jnp.float32)
    o_ref[...] = (acc + b_ref[...]).astype(o_ref.dtype)


def _pick_images_per_step(N, H, rows_target=256):
    """Largest divisor of N with B*H <= rows_target (at least 1)."""
    b = min(N, max(1, rows_target // H))
    while N % b:
        b -= 1
    return b


def dw_block_forward_nhwc(x_nhwc, expand_w, expand_b, dw_w, dw_b, pw_w, pw_b):
    """dw_block forward, NHWC in / NHWC out (no boundary transposes)."""
    N, H, W, Cin = x_nhwc.shape
    Cexp = expand_w.shape[0]
    Cout = pw_w.shape[0]
    K = dw_w.shape[-1]
    pad = K // 2
    assert K % 2 == 1, "padding='same' fast path assumes odd kernel size"
    assert H > 2 * pad and W > 2 * pad

    We = expand_w.reshape(Cexp, Cin).astype(jnp.float32)      # 1x1 expand
    Wd = dw_w.reshape(Cexp, K, K).astype(jnp.float32)         # depthwise (groups=Cexp)
    Wp = pw_w.reshape(Cout, Cexp).astype(jnp.float32)         # 1x1 pointwise

    # ---- algebraic fusion (valid because the activation is Identity):
    #   W_fused[kh,kw,ci,co] = sum_e pw[co,e] * dw[e,kh,kw] * expand[e,ci]
    Wf = jnp.einsum('oe,ekl,ec->klco', Wp, Wd, We)            # (K, K, Cin, Cout)

    # Border-aware spatial bias map: 'same' zero-pads y = expand(x)+b_e, so near the
    # border some dw taps see 0 instead of b_e -> effective bias varies with (h, w).
    ih = np.zeros((H, K), np.float32)                         # ih[h, kh] = tap in bounds
    iw = np.zeros((W, K), np.float32)
    for a in range(K):
        d = a - pad
        ih[max(0, -d):H - max(0, d), a] = 1.0
        iw[max(0, -d):W - max(0, d), a] = 1.0
    ones_conv = jnp.einsum('hk,wl,ekl->ehw', ih, iw, Wd)      # (Cexp, H, W)
    bias_map = (jnp.einsum('oe,e,ehw->hwo', Wp, expand_b.astype(jnp.float32), ones_conv)
                + (Wp @ dw_b.astype(jnp.float32))[None, None, :]
                + pw_b.astype(jnp.float32)[None, None, :])    # (H, W, Cout)
    bias_map = bias_map.reshape(H, W * Cout)                  # f32, lane-dense rows

    # ---- block-Toeplitz weights over W (horizontal taps + Cin contraction folded in),
    # then fold the K vertical taps into the contraction axis as well.
    shift = np.zeros((K, W, W), np.float32)                   # shift[kw, w_in, w_out]
    for kw in range(K):
        d = kw - pad
        for wo in range(W):
            wi = wo + d
            if 0 <= wi < W:
                shift[kw, wi, wo] = 1.0
    T = jnp.einsum('kiw,akco->aicwo', shift, Wf)              # (K, W, Cin, W, Cout)
    KWC, WCo = K * W * Cin, W * Cout
    T_flat = T.reshape(KWC, WCo).astype(jnp.bfloat16)         # (192, 128) bf16

    # ---- activations: flatten rows, pad the vertical halo, concat the K vertical taps
    # along the contraction axis, cast to bf16 ONCE (all in the XLA wrapper).
    x2d = x_nhwc.reshape(N, H, W * Cin)
    x2dp = jnp.pad(x2d, ((0, 0), (pad, pad), (0, 0)))         # (N, H+K-1, W*Cin)
    x_cat = jnp.concatenate([x2dp[:, kh:kh + H, :] for kh in range(K)], axis=-1)
    x_cat = x_cat.reshape(N * H, KWC).astype(jnp.bfloat16)    # (N*H, K*W*Cin) bf16

    # ---- grid: B whole images per step stacked into the matmul M dimension.
    B = _pick_images_per_step(N, H)
    G = N // B
    TM = B * H
    assert G == 1 or TM % 8 == 0, "row tile must be a multiple of 8 sublanes"
    bias_tile = jnp.tile(bias_map, (B, 1))                    # (TM, W*Cout) f32, invariant

    out_itemsize = jnp.dtype(x_nhwc.dtype).itemsize
    vmem_needed = (2 * TM * KWC * 2          # x block, double-buffered, bf16
                   + KWC * WCo * 2           # T_flat, single-buffered
                   + TM * WCo * 4            # bias tile, single-buffered
                   + 2 * TM * WCo * out_itemsize)             # out block, double-buffered
    vmem_limit = int(min(128 * 1024 * 1024, max(4 * 1024 * 1024, 2 * vmem_needed)))

    # NOTE: flops counts the structural Toeplitz zeros (accurate as MXU work).
    flops = 2 * (N * H) * KWC * WCo
    bytes_accessed = (x_cat.size * 2 + T_flat.size * 2 + bias_tile.size * 4
                      + N * H * WCo * out_itemsize)

    # Split across TensorCores only when each step carries enough matmul rows.
    semantics = ("parallel",) if (G >= 2 and TM >= 64) else ("arbitrary",)

    out2d = pl.pallas_call(
        _fused_conv_kernel,
        out_shape=jax.ShapeDtypeStruct((N * H, WCo), x_nhwc.dtype),
        grid_spec=pltpu.PrefetchScalarGridSpec(
            num_scalar_prefetch=0,
            grid=(G,),
            in_specs=[
                pl.BlockSpec((TM, KWC), lambda g: (g, 0)),
                pl.BlockSpec((KWC, WCo), lambda g: (0, 0),
                             pipeline_mode=pl.Buffered(1)),
                pl.BlockSpec((TM, WCo), lambda g: (0, 0),
                             pipeline_mode=pl.Buffered(1)),
            ],
            out_specs=pl.BlockSpec((TM, WCo), lambda g: (g, 0)),
        ),
        compiler_params=pltpu.CompilerParams(
            dimension_semantics=semantics,
            vmem_limit_bytes=vmem_limit),
        cost_estimate=pl.CostEstimate(flops=flops, transcendentals=0,
                                      bytes_accessed=bytes_accessed),
    )(x_cat, T_flat, bias_tile)

    return out2d.reshape(N, H, W, Cout)                       # free reshape back


@jax.jit
def dw_block_forward(x_nchw, expand_w, expand_b, dw_w, dw_b, pw_w, pw_b):
    """PyTorch-convention (NCHW) wrapper; boundary transposes fuse under jit."""
    out_nhwc = dw_block_forward_nhwc(jnp.transpose(x_nchw, (0, 2, 3, 1)),
                                     expand_w, expand_b, dw_w, dw_b, pw_w, pw_b)
    return jnp.transpose(out_nhwc, (0, 3, 1, 2))


def _reference_dw_block(x, expand_w, expand_b, dw_w, dw_b, pw_w, pw_b):
    """Pure-JAX (lax conv) reference of the unfused module for a sanity check."""
    dn = ('NCHW', 'OIHW', 'NCHW')
    y = lax.conv_general_dilated(x, expand_w, (1, 1), 'SAME', dimension_numbers=dn)
    y = y + expand_b.reshape(1, -1, 1, 1)
    # activation = Identity (module default)
    z = lax.conv_general_dilated(y, dw_w, (1, 1), 'SAME', dimension_numbers=dn,
                                 feature_group_count=dw_w.shape[0])
    z = z + dw_b.reshape(1, -1, 1, 1)
    o = lax.conv_general_dilated(z, pw_w, (1, 1), 'SAME', dimension_numbers=dn)
    return o + pw_b.reshape(1, -1, 1, 1)


if __name__ == "__main__":
    # dw_block(in_channels=4, out_channels=8, scale=1, activation=None -> Identity,
    #          groups=None -> depthwise, padding='same', kernel_size=3); batch=2, 16x16.
    N, Cin, H, W = 2, 4, 16, 16
    scale, Cout, K = 1, 8, 3
    Cexp = scale * Cin

    key = jax.random.PRNGKey(0)
    ks = jax.random.split(key, 7)
    x = jax.random.normal(ks[0], (N, Cin, H, W), jnp.float32)
    expand_w = jax.random.normal(ks[1], (Cexp, Cin, 1, 1), jnp.float32) * 0.3
    expand_b = jax.random.normal(ks[2], (Cexp,), jnp.float32) * 0.1
    dw_w = jax.random.normal(ks[3], (Cexp, 1, K, K), jnp.float32) * 0.3
    dw_b = jax.random.normal(ks[4], (Cexp,), jnp.float32) * 0.1
    pw_w = jax.random.normal(ks[5], (Cout, Cexp, 1, 1), jnp.float32) * 0.3
    pw_b = jax.random.normal(ks[6], (Cout,), jnp.float32) * 0.1

    out = jax.block_until_ready(
        dw_block_forward(x, expand_w, expand_b, dw_w, dw_b, pw_w, pw_b))

    ref = jax.block_until_ready(
        _reference_dw_block(x, expand_w, expand_b, dw_w, dw_b, pw_w, pw_b))
    # bf16 MXU operands (weights + activations) -> ~1e-2 relative error vs f32 reference.
    np.testing.assert_allclose(np.asarray(out), np.asarray(ref), rtol=2e-2, atol=2e-2)
    assert out.shape == (N, Cout, H, W)
    print("KERNEL_OK")
</pallas_src>

<mosaic_0001>
module attributes {stable_mosaic.version = 11 : i64} {
  func.func @_fused_conv_kernel(%arg0: i32, %arg1: memref<32x192xbf16, #tpu.memory_space<vmem>>, %arg2: memref<192x128xbf16, #tpu.memory_space<vmem>>, %arg3: memref<32x128xf32, #tpu.memory_space<vmem>>, %arg4: memref<32x128xf32, #tpu.memory_space<vmem>>) attributes {dimension_semantics = [#tpu.dimension_semantics<arbitrary>], iteration_bounds = array<i64: 1>, scalar_prefetch = 0 : i64, scratch_operands = 0 : i64, tpu.core_type = #tpu.core_type<tc>, window_params = [{transform_indices = @transform_0, window_bounds = array<i64: 32, 192>}, {pipeline_mode = #tpu.pipeline_mode<synchronous>, transform_indices = @transform_1, window_bounds = array<i64: 192, 128>}, {pipeline_mode = #tpu.pipeline_mode<synchronous>, transform_indices = @transform_2, window_bounds = array<i64: 32, 128>}, {transform_indices = @transform_3, window_bounds = array<i64: 32, 128>}]} {
    %c0 = arith.constant 0 : index
    %c0_0 = arith.constant 0 : index
    %0 = vector.load %arg1[%c0, %c0_0] : memref<32x192xbf16, #tpu.memory_space<vmem>>, vector<32x192xbf16>
    %c0_1 = arith.constant 0 : index
    %c0_2 = arith.constant 0 : index
    %1 = vector.load %arg2[%c0_1, %c0_2] : memref<192x128xbf16, #tpu.memory_space<vmem>>, vector<192x128xbf16>
    %cst = arith.constant dense<0.000000e+00> : vector<32x128xf32>
    %2 = tpu.matmul %0, %1, %cst {dimension_numbers = #tpu.dot_dimension_numbers<[1], [0], [0], [1], [0, 0, 1, 1], [], []>} : vector<32x192xbf16>, vector<192x128xbf16>, vector<32x128xf32> -> vector<32x128xf32>
    %c0_3 = arith.constant 0 : index
    %c0_4 = arith.constant 0 : index
    %3 = vector.load %arg3[%c0_3, %c0_4] : memref<32x128xf32, #tpu.memory_space<vmem>>, vector<32x128xf32>
    %4 = arith.addf %2, %3 : vector<32x128xf32>
    %c0_5 = arith.constant 0 : index
    %c0_6 = arith.constant 0 : index
    %5 = vector.load %arg4[%c0_5, %c0_6] : memref<32x128xf32, #tpu.memory_space<vmem>>, vector<32x128xf32>
    tpu.vector_store %arg4[%c0_5, %c0_6], %4 {strides = array<i32>} : memref<32x128xf32, #tpu.memory_space<vmem>>, vector<32x128xf32>,
    return
  }
  func.func @transform_0(%arg0: i32) -> (i32, i32) {
    %c0_i32 = arith.constant 0 : i32
    %c0_i32_0 = arith.constant 0 : i32
    return %arg0, %c0_i32 : i32, i32
  }
  func.func @transform_1(%arg0: i32) -> (i32, i32) {
    %c0_i32 = arith.constant 0 : i32
    %c0_i32_0 = arith.constant 0 : i32
    %c0_i32_1 = arith.constant 0 : i32
    return %c0_i32, %c0_i32_0 : i32, i32
  }
  func.func @transform_2(%arg0: i32) -> (i32, i32) {
    %c0_i32 = arith.constant 0 : i32
    %c0_i32_0 = arith.constant 0 : i32
    %c0_i32_1 = arith.constant 0 : i32
    return %c0_i32, %c0_i32_0 : i32, i32
  }
  func.func @transform_3(%arg0: i32) -> (i32, i32) {
    %c0_i32 = arith.constant 0 : i32
    %c0_i32_0 = arith.constant 0 : i32
    return %arg0, %c0_i32 : i32, i32
  }
}

</mosaic_0001>

<llo_original>
// kernel: dw_block_forward.1
$region0: #{dw_block_forward.1}
  #allocation0 [shape = 'u32[]', space=smem, size = 0x4, offset = 0x4, fixed_abs, tag = 'smem constant byte address 0x4 - core index']
  #allocation1 [shape = 'u32[144,128]{1,0:T(1,128)}', space=vmem, size = 0x12000, scoped, tag = 'internal scratch']
  %s0 = inlined_call_operand.vmem [shape: bf16[32,192], index: 0, kind: input, shape index: {}]
  %s1 = inlined_call_operand.vmem [shape: bf16[192,128], index: 1, kind: input, shape index: {}]
  %s2 = inlined_call_operand.vmem [shape: f32[32,128], index: 2, kind: input, shape index: {}]
  %s3 = inlined_call_operand.vmem [shape: f32[32,128], index: 3, kind: output, shape index: {}]
  %s4 = sld [smem:[#allocation0]]
  $region22: #{dw_block_forward.1} parent=0
    _
  %s6 = ssub.s32 1, %s4
  %s7 = scalar_select 0, %s6, %s4
  // Predicated region
  $region2: #{dw_block_forward.1} parent=0 // pred_check
    _
  $region3: #{dw_block_forward.1} parent=0 // pred_check_branch
    %9 = sbr.rel (0) target = $region5
  $region4: #{dw_block_forward.1} parent=0 // pred_region
    _
  $region5: #{dw_block_forward.1} parent=0 // pred_fallthru
    _
  // Predicated region
  $region6: #{dw_block_forward.1} parent=0 // pred_check
    _
  $region7: #{dw_block_forward.1} parent=0 // pred_check_branch
    %11 = sbr.rel (0) target = $region9
  $region8: #{dw_block_forward.1} parent=0 // pred_region
    _
  $region9: #{dw_block_forward.1} parent=0 // pred_fallthru
    _
  // Predicated region
  $region10: #{dw_block_forward.1} parent=0 // pred_check
    _
  $region11: #{dw_block_forward.1} parent=0 // pred_check_branch
    %13 = sbr.rel (0) target = $region13
  $region12: #{dw_block_forward.1} parent=0 // pred_region
    _
  $region13: #{dw_block_forward.1} parent=0 // pred_fallthru
    _
  %v15 = vld [vmem:[%s0] sm:$0xff]
  %v16 = vld [vmem:[%s0 + $0x8] sm:$0xff]
  %v17 = vld [vmem:[%s0 + $0x10] sm:$0xff]
  %v18 = vld [vmem:[%s0 + $0x18] sm:$0xff]
  %v19 = vld [vmem:[%s1] sm:$0xf]
  %v20 = vld [vmem:[%s1 + $0x4] sm:$0xf]
  %v21 = vld [vmem:[%s1 + $0x8] sm:$0xf]
  %v22 = vld [vmem:[%s1 + $0xc] sm:$0xf]
  %v23 = vld [vmem:[%s1 + $0x10] sm:$0xf]
  %v24 = vld [vmem:[%s1 + $0x14] sm:$0xf]
  %v25 = vld [vmem:[%s1 + $0x18] sm:$0xf]
  %v26 = vld [vmem:[%s1 + $0x1c] sm:$0xf]
  %v27 = vld [vmem:[%s1 + $0x20] sm:$0xf]
  %v28 = vld [vmem:[%s1 + $0x24] sm:$0xf]
  %v29 = vld [vmem:[%s1 + $0x28] sm:$0xf]
  %v30 = vld [vmem:[%s1 + $0x2c] sm:$0xf]
  %v31 = vld [vmem:[%s1 + $0x30] sm:$0xf]
  %v32 = vld [vmem:[%s1 + $0x34] sm:$0xf]
  %v33 = vld [vmem:[%s1 + $0x38] sm:$0xf]
  %v34 = vld [vmem:[%s1 + $0x3c] sm:$0xf]
  %v35 = vld [vmem:[%s1 + $0x40] sm:$0xf]
  %v36 = vld [vmem:[%s1 + $0x44] sm:$0xf]
  %v37 = vld [vmem:[%s1 + $0x48] sm:$0xf]
  %v38 = vld [vmem:[%s1 + $0x4c] sm:$0xf]
  %v39 = vld [vmem:[%s1 + $0x50] sm:$0xf]
  %v40 = vld [vmem:[%s1 + $0x54] sm:$0xf]
  %v41 = vld [vmem:[%s1 + $0x58] sm:$0xf]
  %v42 = vld [vmem:[%s1 + $0x5c] sm:$0xf]
  %v43 = vld [vmem:[%s2] sm:$0xff]
  %v44 = vld [vmem:[%s2 + $0x8] sm:$0xff]
  %v45 = vld [vmem:[%s2 + $0x10] sm:$0xff]
  %v46 = vld [vmem:[%s2 + $0x18] sm:$0xff]
  %v51 = vunpack.c.l.b16 %v15
  %v52 = vunpack.c.h.b16 %v15
  %v53 = vunpack.c.l.b16 %v16
  %v54 = vunpack.c.h.b16 %v16
  %v55 = vunpack.c.l.b16 %v17
  %v56 = vunpack.c.h.b16 %v17
  %v57 = vunpack.c.l.b16 %v18
  %v58 = vunpack.c.h.b16 %v18
  %v59 = vpack.c.b16 %v53, %v51
  %v60 = vpack.c.b16 %v54, %v52
  %v61 = vpack.c.b16 %v57, %v55
  %v62 = vpack.c.b16 %v58, %v56
  %v89 = vunpack.c.l.b16 %v19
  %v90 = vunpack.c.l.b16 %v20
  %v91 = vunpack.c.l.b16 %v21
  %v92 = vunpack.c.l.b16 %v22
  %v93 = vunpack.c.l.b16 %v23
  %v94 = vunpack.c.l.b16 %v24
  %v95 = vunpack.c.l.b16 %v25
  %v96 = vunpack.c.l.b16 %v26
  %v97 = vunpack.c.l.b16 %v27
  %v98 = vunpack.c.l.b16 %v28
  %v99 = vunpack.c.l.b16 %v29
  %v100 = vunpack.c.l.b16 %v30
  %v101 = vunpack.c.l.b16 %v31
  %v102 = vunpack.c.l.b16 %v32
  %v103 = vunpack.c.l.b16 %v33
  %v104 = vunpack.c.l.b16 %v34
  %v105 = vunpack.c.l.b16 %v35
  %v106 = vunpack.c.l.b16 %v36
  %v107 = vunpack.c.l.b16 %v37
  %v108 = vunpack.c.l.b16 %v38
  %v109 = vunpack.c.l.b16 %v39
  %v110 = vunpack.c.l.b16 %v40
  %v111 = vunpack.c.l.b16 %v41
  %v112 = vunpack.c.l.b16 %v42
  %v113 = vpack.c.b16 %v90, %v89
  %v114 = vpack.c.b16 %v92, %v91
  %v115 = vpack.c.b16 %v94, %v93
  %v116 = vpack.c.b16 %v96, %v95
  %v117 = vpack.c.b16 %v98, %v97
  %v118 = vpack.c.b16 %v100, %v99
  %v119 = vpack.c.b16 %v102, %v101
  %v120 = vpack.c.b16 %v104, %v103
  %v121 = vpack.c.b16 %v106, %v105
  %v122 = vpack.c.b16 %v108, %v107
  %v123 = vpack.c.b16 %v110, %v109
  %v124 = vpack.c.b16 %v112, %v111
  %vm137 = vcmask 523264
  %v139 = vsel %vm137, %v60, 0
  %v142 = vsel %vm137, %v62, 0
  %144 = vmatprep.subr.bf16.mxu0 0
  %145 = vmatpush1.bf16.msra.mxu0 %v113
  %146 = vmatprep.subr.bf16.mxu0 0
  %147 = vmatpush1.bf16.msra.mxu0 %v114
  %148 = vmatprep.subr.bf16.mxu0 0
  %149 = vmatpush1.bf16.msra.mxu0 %v115
  %150 = vmatprep.subr.bf16.mxu0 0
  %151 = vmatpush1.bf16.msra.mxu0 %v116
  %152 = vmatprep.subr.bf16.mxu0 0
  %153 = vmatpush1.bf16.msra.mxu0 %v117
  %154 = vmatprep.subr.bf16.mxu0 0
  %155 = vmatpush1.bf16.msra.mxu0 %v118
  %156 = vmatprep.subr.bf16.mxu0 0
  %157 = vmatpush1.bf16.msra.mxu0 %v119
  %158 = vmatprep.subr.bf16.mxu0 0
  %159 = vmatpush1.bf16.msra.mxu0 %v120
  %160 = vmatprep.subr.bf16.mxu0 0
  %161 = vmatpush1.bf16.msra.mxu0 %v121
  %162 = vmatprep.subr.bf16.mxu0 0
  %163 = vmatpush1.bf16.msra.mxu0 %v122
  %164 = vmatprep.subr.bf16.mxu0 0
  %165 = vmatpush1.bf16.msra.mxu0 %v123
  %166 = vmatprep.subr.bf16.mxu0 0
  %167 = vmatpush1.bf16.msra.mxu0 %v124
  %168 = vmatprep.subr.bf16.mxu0 0
  %169 = vmatpush1.bf16.msra.mxu0 0
  %170 = vmatprep.subr.bf16.mxu0 0
  %171 = vmatpush1.bf16.msra.mxu0 0
  %172 = vmatprep.subr.bf16.mxu0 0
  %173 = vmatpush1.bf16.msra.mxu0 0
  %174 = vmatprep.subr.bf16.mxu0 0
  %175 = vmatpush1.bf16.msra.mxu0 0
  %176 = vmatprep.mubr.bf16.mxu0 %v139
  %177 = vmatmul.mubr.bf16.gmra.mrb[0].mxu0 %v59
  %v178 = vpop.f32.mrb[0].mxu0
  %v179 = vadd.f32 %v43, %v178
  %v180 = vpop.f32.mrb[0].mxu0
  %v181 = vpop.f32.mrb[0].mxu0
  %v182 = vadd.f32 %v44, %v181
  %v183 = vpop.f32.mrb[0].mxu0
  %184 = vmatprep.mubr.bf16.mxu0 %v142
  %185 = vmatmul.mubr.bf16.gmra.mrb[0].mxu0 %v61
  %v186 = vpop.f32.mrb[0].mxu0
  %v187 = vadd.f32 %v45, %v186
  %v188 = vpop.f32.mrb[0].mxu0
  %v189 = vpop.f32.mrb[0].mxu0
  %v190 = vadd.f32 %v46, %v189
  %v191 = vpop.f32.mrb[0].mxu0
  %192 = vdwg.mxu0
  %193 = vst [vmem:[%s3] sm:$0xff] %v179
  %194 = vst [vmem:[%s3 + $0x8] sm:$0xff] %v182
  %195 = vst [vmem:[%s3 + $0x10] sm:$0xff] %v187
  %196 = vst [vmem:[%s3 + $0x18] sm:$0xff] %v190
  // Predicated region
  $region14: #{dw_block_forward.1} parent=0 // pred_check
    _
  $region15: #{dw_block_forward.1} parent=0 // pred_check_branch
    %198 = sbr.rel (0) target = $region17
  $region16: #{dw_block_forward.1} parent=0 // pred_region
    _
  $region17: #{dw_block_forward.1} parent=0 // pred_fallthru
    _
  // Predicated region
  $region18: #{dw_block_forward.1} parent=0 // pred_check
    _
  $region19: #{dw_block_forward.1} parent=0 // pred_check_branch
    %200 = sbr.rel (0) target = $region21
  $region20: #{dw_block_forward.1} parent=0 // pred_region
    _
  $region21: #{dw_block_forward.1} parent=0 // pred_fallthru
    _

</llo_original>
